<compile_context>
chip_gen: v6e
topology: v6e:2x2x1
jax: 0.10.0
libtpu: 0.0.40
codegen_flags: <defaults>
</compile_context>

<pallas_src>
import functools

import jax
import jax.numpy as jnp
from jax.experimental import pallas as pl
from jax.experimental.pallas import tpu as pltpu

_LANE = 128
_NEG_PAD = -1e30  # f32 bias fill for padded class lanes; exp() underflows to exactly 0


def _round_up(x, m):
    return ((x + m - 1) // m) * m


# --------------------------------------------------------------------------------------------
# Generation-aware capacities (batch-tile cap, VMEM budget used for tiling, explicit limit).
# --------------------------------------------------------------------------------------------
def _chip_caps():
    kind = ""
    try:
        kind = jax.devices()[0].device_kind.lower()
    except Exception:
        pass
    if "v7" in kind:       # 64 MiB physical VMEM per TC, 2 TCs per chip
        return {"m_cap": 256, "vmem_budget": 36 << 20, "vmem_limit": 48 << 20, "two_tc": True}
    if "v6" in kind:       # 128 MiB VMEM, 256-wide MXU
        return {"m_cap": 256, "vmem_budget": 72 << 20, "vmem_limit": 96 << 20, "two_tc": False}
    # v5e (128-wide MXU, 16 MiB scoped default) and anything unknown: conservative
    return {"m_cap": 128, "vmem_budget": 48 << 20, "vmem_limit": 64 << 20, "two_tc": False}


def _choose_batch_tile(B, S, v_pad, h_pad, c_pad, weight_bytes, caps):
    """Largest VMEM-fitting batch tile that divides B, keeps blocks (8,128)-legal, and (on
    2-TC chips) leaves at least 2 grid steps when possible."""
    def vmem_need(bt):
        rows = bt * S
        return (2 * rows * 4              # ids block (double-buffered)
                + rows * v_pad * 2        # in-kernel one-hot (bf16)
                + 3 * rows * h_pad * 4    # per-tap matmul out / accumulator / masked copy (f32)
                + 2 * bt * c_pad * 4      # output block (double-buffered)
                + weight_bytes)           # single-buffered weights

    legal = [bt for bt in range(1, B + 1)
             if B % bt == 0 and (bt == B or bt % 8 == 0)]
    fitting = [bt for bt in legal
               if bt <= caps["m_cap"] and vmem_need(bt) <= caps["vmem_budget"]]
    if not fitting:
        fitting = [min(legal)]
    bt = max(fitting)
    if caps["two_tc"]:
        split = [c for c in fitting if B // c >= 2]
        if split:                          # keep both TensorCores busy when B allows
            bt = max(split)
    return bt


def _const_weight_spec(shape):
    """Constant-index (grid-invariant) weight block; single-buffered when the API allows."""
    index_map = lambda i: (0,) * len(shape)
    if hasattr(pl, "Buffered"):
        try:
            return pl.BlockSpec(shape, index_map, pipeline_mode=pl.Buffered(1))
        except TypeError:
            pass
    return pl.BlockSpec(shape, index_map)


# --------------------------------------------------------------------------------------------
# Fused kernel
# --------------------------------------------------------------------------------------------
def _make_fused_kernel(f_max, seq_len, v_pad, h_pad, compute_dtype):
    S = seq_len

    def kernel(ids_ref, *refs):
        w_taps = refs[:f_max]                                   # f_max x (Vpad, Hpad) bf16
        (b_ref, valid_ref, whw_ref, bhw_ref,
         wlin_ref, blin_ref, o_ref) = refs[f_max:]

        rows = ids_ref.shape[0]                                 # bt * S (static)
        bt = rows // S

        # ---- in-kernel one-hot (exact in bf16), lane-dense Vpad ----
        ids = ids_ref[...]                                      # (rows, 1) int32
        vocab = jax.lax.broadcasted_iota(jnp.int32, (rows, v_pad), 1)
        onehot = (vocab == ids).astype(compute_dtype)           # (rows, Vpad)

        # ---- conv as matmul-then-shift, all filter groups fused into N = Hpad ----
        # s[p, h] = sum_j onehot[p + j] @ W_j[:, h] ; rolled wrap / straddle rows land only in
        # positions that are masked below (or in zero-weight columns), so they never pollute
        # a valid window.
        s = jnp.dot(onehot, w_taps[0][...], preferred_element_type=jnp.float32)
        for j in range(1, f_max):
            yj = jnp.dot(onehot, w_taps[j][...], preferred_element_type=jnp.float32)
            s = s + pltpu.roll(yj, shift=rows - j, axis=0)      # narrow XLU rotate, not wide x
        s = jnp.maximum(s + b_ref[...], 0.0)                    # bias + ReLU (f32)

        # ---- mask invalid (straddling / too-short) windows, segmented max-pool over time ----
        # NOTE: mask fill 0 is only valid because pooling happens AFTER ReLU (values >= 0).
        s3 = s.reshape(bt, S, h_pad)
        pos = jax.lax.broadcasted_iota(jnp.int32, (bt, S, h_pad), 1)
        s3 = jnp.where(pos < valid_ref[...], s3, 0.0)           # single per-column valid length
        pred = jnp.max(s3, axis=1)                              # (bt, Hpad) f32

        # ---- highway (kept in f32: tiny matmul, avoids bf16 rounding of activations) ----
        h = jnp.dot(pred, whw_ref[...], preferred_element_type=jnp.float32) + bhw_ref[...]
        gate = pl.reciprocal(1.0 + jnp.exp(-h), approx=True)    # sigmoid; divide on EUP slot
        hw = gate * jnp.maximum(h, 0.0) + (1.0 - gate) * pred

        # TODO(synk): dropout is identity here (inference semantics); training-mode Bernoulli
        # mask is not implemented.

        # ---- linear + log-softmax (f32; padded class lanes carry -1e30 bias -> exp == 0) ----
        logits = jnp.dot(hw, wlin_ref[...], preferred_element_type=jnp.float32) + blin_ref[...]
        m = jnp.max(logits, axis=-1, keepdims=True)
        z = logits - m
        lse = jnp.log(jnp.sum(jnp.exp(z), axis=-1, keepdims=True))
        o_ref[...] = (z - lse).astype(o_ref.dtype)              # lane-dense (bt, Cpad) store

    return kernel


# --------------------------------------------------------------------------------------------
# Host-side weight packing: fuse groups per tap, pre-transpose, zero-pad to lane multiples.
# --------------------------------------------------------------------------------------------
def pack_params(params, seq_len, compute_dtype=jnp.bfloat16):
    conv_w, conv_b = params["conv_w"], params["conv_b"]
    num_filters = [int(w.shape[0]) for w in conv_w]
    filter_sizes = [int(w.shape[1]) for w in conv_w]
    V = int(conv_w[0].shape[2])
    H = sum(num_filters)
    C = int(params["lin_w"].shape[0])
    f_max = max(filter_sizes)

    v_pad = _round_up(V, _LANE)
    h_pad = _round_up(max(H, _LANE), _LANE)
    c_pad = _round_up(max(C, _LANE), _LANE)

    # One (Vpad, Hpad) weight per tap j, all groups side-by-side; zero columns where a group
    # has no tap j (so garbage rows multiplied by them contribute exactly 0).
    w_taps = [jnp.zeros((v_pad, h_pad), compute_dtype) for _ in range(f_max)]
    b_row = jnp.zeros((1, h_pad), jnp.float32)
    valid_row = jnp.zeros((1, h_pad), jnp.int32)     # padded columns: valid length 0 -> all masked
    col = 0
    for w, b, Fg, Ng in zip(conv_w, conv_b, filter_sizes, num_filters):
        for j in range(Fg):
            w_taps[j] = w_taps[j].at[:V, col:col + Ng].set(
                jnp.transpose(w[:, j, :]).astype(compute_dtype))        # (V, Ng)
        b_row = b_row.at[0, col:col + Ng].set(b.astype(jnp.float32))
        valid_row = valid_row.at[0, col:col + Ng].set(seq_len - Fg + 1)
        col += Ng

    hw_w = jnp.zeros((h_pad, h_pad), jnp.float32).at[:H, :H].set(
        jnp.transpose(params["hw_w"]).astype(jnp.float32))
    hw_b = jnp.zeros((1, h_pad), jnp.float32).at[0, :H].set(params["hw_b"].astype(jnp.float32))
    lin_w = jnp.zeros((h_pad, c_pad), jnp.float32).at[:H, :C].set(
        jnp.transpose(params["lin_w"]).astype(jnp.float32))
    lin_b = jnp.full((1, c_pad), _NEG_PAD, jnp.float32).at[0, :C].set(
        params["lin_b"].astype(jnp.float32))

    return {"w_taps": tuple(w_taps), "conv_b": b_row, "valid": valid_row,
            "hw_w": hw_w, "hw_b": hw_b, "lin_w": lin_w, "lin_b": lin_b}


# --------------------------------------------------------------------------------------------
# Forward wrapper
# --------------------------------------------------------------------------------------------
@functools.partial(jax.jit, static_argnames=("batch_size", "seq_len", "num_classes", "out_dtype"))
def annex_forward(ids, packed, *, batch_size, seq_len, num_classes, out_dtype=jnp.float32):
    """ids: (batch_size * seq_len,) int32 token ids (== argmax of the module's one-hot input).
    Returns (batch_size, num_classes) log-probs, identical to the module applied to
    one_hot(ids, vocab_size)."""
    B, S = batch_size, seq_len
    f_max = len(packed["w_taps"])
    v_pad, h_pad = (int(d) for d in packed["w_taps"][0].shape)
    c_pad = int(packed["lin_b"].shape[1])
    compute_dtype = packed["w_taps"][0].dtype

    caps = _chip_caps()
    weight_bytes = (f_max * v_pad * h_pad * 2 + h_pad * h_pad * 4
                    + h_pad * c_pad * 4 + (3 * h_pad + c_pad) * 4)
    bt = _choose_batch_tile(B, S, v_pad, h_pad, c_pad, weight_bytes, caps)
    grid = (B // bt,)

    ids2 = ids.reshape(B * S, 1).astype(jnp.int32)

    in_specs = [pl.BlockSpec((bt * S, 1), lambda i: (i, 0))]
    in_specs += [_const_weight_spec((v_pad, h_pad)) for _ in range(f_max)]
    in_specs += [_const_weight_spec((1, h_pad)),        # conv bias
                 _const_weight_spec((1, h_pad)),        # per-column valid length
                 _const_weight_spec((h_pad, h_pad)),    # highway W^T
                 _const_weight_spec((1, h_pad)),        # highway b
                 _const_weight_spec((h_pad, c_pad)),    # linear W^T
                 _const_weight_spec((1, c_pad))]        # linear b (padded lanes = -1e30)

    kernel = _make_fused_kernel(f_max, S, v_pad, h_pad, compute_dtype)

    flops = (2 * B * S * f_max * v_pad * h_pad      # conv
             + 2 * B * h_pad * h_pad                # highway
             + 2 * B * h_pad * c_pad)               # linear
    transcendentals = B * (2 * h_pad + c_pad)       # sigmoid exp + softmax exp/log
    bytes_accessed = (B * S * 4 + weight_bytes
                      + B * c_pad * jnp.dtype(out_dtype).itemsize)

    out_pad = pl.pallas_call(
        kernel,
        out_shape=jax.ShapeDtypeStruct((B, c_pad), out_dtype),
        grid=grid,
        in_specs=in_specs,
        out_specs=pl.BlockSpec((bt, c_pad), lambda i: (i, 0)),
        compiler_params=pltpu.CompilerParams(
            dimension_semantics=("parallel",),
            vmem_limit_bytes=caps["vmem_limit"]),
        cost_estimate=pl.CostEstimate(flops=flops, transcendentals=transcendentals,
                                      bytes_accessed=bytes_accessed),
    )(ids2, *packed["w_taps"], packed["conv_b"], packed["valid"],
      packed["hw_w"], packed["hw_b"], packed["lin_w"], packed["lin_b"])
    return out_pad[:, :num_classes]


# --------------------------------------------------------------------------------------------
# Pure-JAX reference (f32), matching the PyTorch module exactly.
# --------------------------------------------------------------------------------------------
def annex_forward_ref(x, params, *, batch_size, seq_len, vocab_size):
    emb = x.reshape(batch_size, seq_len, vocab_size).astype(jnp.float32)
    pools = []
    for w, b in zip(params["conv_w"], params["conv_b"]):
        N, F_, V = w.shape
        L = seq_len - F_ + 1
        s = jnp.zeros((batch_size, L, N), jnp.float32)
        for j in range(F_):
            s = s + jnp.einsum("blv,nv->bln", emb[:, j:j + L, :], w[:, j, :])
        s = jax.nn.relu(s + b)
        pools.append(jnp.max(s, axis=1))
    pred = jnp.concatenate(pools, axis=1)
    h = pred @ params["hw_w"].T + params["hw_b"]
    g = jax.nn.sigmoid(h)
    pred = g * jax.nn.relu(h) + (1.0 - g) * pred
    logits = pred @ params["lin_w"].T + params["lin_b"]
    return jax.nn.log_softmax(logits, axis=-1)


def init_params(key, vocab_size, filter_sizes, num_filters, num_classes):
    """All params ~ Normal(0, 0.02), matching init_parameters()."""
    std = 0.02
    keys = jax.random.split(key, 2 * len(filter_sizes) + 4)
    conv_w, conv_b = [], []
    k = 0
    for n, f in zip(num_filters, filter_sizes):
        conv_w.append(std * jax.random.normal(keys[k], (n, f, vocab_size), jnp.float32)); k += 1
        conv_b.append(std * jax.random.normal(keys[k], (n,), jnp.float32)); k += 1
    H = sum(num_filters)
    hw_w = std * jax.random.normal(keys[k], (H, H), jnp.float32); k += 1
    hw_b = std * jax.random.normal(keys[k], (H,), jnp.float32); k += 1
    lin_w = std * jax.random.normal(keys[k], (num_classes, H), jnp.float32); k += 1
    lin_b = std * jax.random.normal(keys[k], (num_classes,), jnp.float32)
    return {"conv_w": conv_w, "conv_b": conv_b,
            "hw_w": hw_w, "hw_b": hw_b, "lin_w": lin_w, "lin_b": lin_b}


if __name__ == "__main__":
    num_classes = 4
    vocab_size = 32
    emb_dim = 16            # present in the module's __init__ but unused in forward
    filter_sizes = (2, 3)
    num_filters = (8, 8)
    dropout = 0.25          # identity at inference
    batch_size = 2
    g_sequence_len = 8

    key = jax.random.PRNGKey(0)
    k_param, k_x = jax.random.split(key)
    params = init_params(k_param, vocab_size, filter_sizes, num_filters, num_classes)
    packed = pack_params(params, seq_len=g_sequence_len, compute_dtype=jnp.bfloat16)

    # Token ids; the module's one-hot input is reconstructed inside the kernel.
    ids = jax.random.randint(k_x, (batch_size * g_sequence_len,), 0, vocab_size,
                             dtype=jnp.int32)

    out = annex_forward(ids, packed, batch_size=batch_size, seq_len=g_sequence_len,
                        num_classes=num_classes)
    out = jax.block_until_ready(out)

    assert out.shape == (batch_size, num_classes)
    assert bool(jnp.all(jnp.isfinite(out)))
    # log-softmax rows must sum to 1 in prob space (padded classes contribute exactly 0)
    assert jnp.allclose(jnp.sum(jnp.exp(out), axis=1), 1.0, atol=1e-5)

    # match the pure-JAX f32 reference applied to the same one-hot input
    x_onehot = jax.nn.one_hot(ids, vocab_size, dtype=jnp.float32)
    ref = annex_forward_ref(x_onehot, params, batch_size=batch_size,
                            seq_len=g_sequence_len, vocab_size=vocab_size)
    assert jnp.allclose(out, ref, atol=1e-2, rtol=1e-2)
    print("KERNEL_OK")
</pallas_src>

<mosaic_0001>
module attributes {stable_mosaic.version = 11 : i64} {
  func.func @kernel(%arg0: i32, %arg1: memref<16x1xi32, #tpu.memory_space<vmem>>, %arg2: memref<128x128xbf16, #tpu.memory_space<vmem>>, %arg3: memref<128x128xbf16, #tpu.memory_space<vmem>>, %arg4: memref<128x128xbf16, #tpu.memory_space<vmem>>, %arg5: memref<1x128xf32, #tpu.memory_space<vmem>>, %arg6: memref<1x128xi32, #tpu.memory_space<vmem>>, %arg7: memref<128x128xf32, #tpu.memory_space<vmem>>, %arg8: memref<1x128xf32, #tpu.memory_space<vmem>>, %arg9: memref<128x128xf32, #tpu.memory_space<vmem>>, %arg10: memref<1x128xf32, #tpu.memory_space<vmem>>, %arg11: memref<2x128xf32, #tpu.memory_space<vmem>>) attributes {dimension_semantics = [#tpu.dimension_semantics<parallel>], iteration_bounds = array<i64: 1>, scalar_prefetch = 0 : i64, scratch_operands = 0 : i64, tpu.core_type = #tpu.core_type<tc>, window_params = [{transform_indices = @transform_0, window_bounds = array<i64: 16, 1>}, {pipeline_mode = #tpu.pipeline_mode<synchronous>, transform_indices = @transform_1, window_bounds = array<i64: 128, 128>}, {pipeline_mode = #tpu.pipeline_mode<synchronous>, transform_indices = @transform_2, window_bounds = array<i64: 128, 128>}, {pipeline_mode = #tpu.pipeline_mode<synchronous>, transform_indices = @transform_3, window_bounds = array<i64: 128, 128>}, {pipeline_mode = #tpu.pipeline_mode<synchronous>, transform_indices = @transform_4, window_bounds = array<i64: 1, 128>}, {pipeline_mode = #tpu.pipeline_mode<synchronous>, transform_indices = @transform_5, window_bounds = array<i64: 1, 128>}, {pipeline_mode = #tpu.pipeline_mode<synchronous>, transform_indices = @transform_6, window_bounds = array<i64: 128, 128>}, {pipeline_mode = #tpu.pipeline_mode<synchronous>, transform_indices = @transform_7, window_bounds = array<i64: 1, 128>}, {pipeline_mode = #tpu.pipeline_mode<synchronous>, transform_indices = @transform_8, window_bounds = array<i64: 128, 128>}, {pipeline_mode = #tpu.pipeline_mode<synchronous>, transform_indices = @transform_9, window_bounds = array<i64: 1, 128>}, {transform_indices = @transform_10, window_bounds = array<i64: 2, 128>}]} {
    %c0 = arith.constant 0 : index
    %c0_0 = arith.constant 0 : index
    %0 = vector.load %arg1[%c0, %c0_0] : memref<16x1xi32, #tpu.memory_space<vmem>>, vector<16x1xi32>
    %1 = tpu.iota {dimensions = array<i32: 1>} : vector<16x128xi32>
    %2 = vector.broadcast %0 : vector<16x1xi32> to vector<16x128xi32>
    %3 = arith.cmpi eq, %1, %2 : vector<16x128xi32>
    %4 = arith.extui %3 : vector<16x128xi1> to vector<16x128xi32>
    %5 = arith.sitofp %4 : vector<16x128xi32> to vector<16x128xf32>
    %6 = arith.truncf %5 : vector<16x128xf32> to vector<16x128xbf16>
    %c0_1 = arith.constant 0 : index
    %c0_2 = arith.constant 0 : index
    %7 = vector.load %arg2[%c0_1, %c0_2] : memref<128x128xbf16, #tpu.memory_space<vmem>>, vector<128x128xbf16>
    %cst = arith.constant dense<0.000000e+00> : vector<16x128xf32>
    %8 = tpu.matmul %6, %7, %cst {dimension_numbers = #tpu.dot_dimension_numbers<[1], [0], [0], [1], [0, 0, 1, 1], [], []>} : vector<16x128xbf16>, vector<128x128xbf16>, vector<16x128xf32> -> vector<16x128xf32>
    %c0_3 = arith.constant 0 : index
    %c0_4 = arith.constant 0 : index
    %9 = vector.load %arg3[%c0_3, %c0_4] : memref<128x128xbf16, #tpu.memory_space<vmem>>, vector<128x128xbf16>
    %cst_5 = arith.constant dense<0.000000e+00> : vector<16x128xf32>
    %10 = tpu.matmul %6, %9, %cst_5 {dimension_numbers = #tpu.dot_dimension_numbers<[1], [0], [0], [1], [0, 0, 1, 1], [], []>} : vector<16x128xbf16>, vector<128x128xbf16>, vector<16x128xf32> -> vector<16x128xf32>
    %c15_i32 = arith.constant 15 : i32
    %11 = tpu.dynamic_rotate %10 by %c15_i32 dim 0 : vector<16x128xf32>, i32 -> vector<16x128xf32>
    %12 = arith.addf %8, %11 : vector<16x128xf32>
    %c0_6 = arith.constant 0 : index
    %c0_7 = arith.constant 0 : index
    %13 = vector.load %arg4[%c0_6, %c0_7] : memref<128x128xbf16, #tpu.memory_space<vmem>>, vector<128x128xbf16>
    %cst_8 = arith.constant dense<0.000000e+00> : vector<16x128xf32>
    %14 = tpu.matmul %6, %13, %cst_8 {dimension_numbers = #tpu.dot_dimension_numbers<[1], [0], [0], [1], [0, 0, 1, 1], [], []>} : vector<16x128xbf16>, vector<128x128xbf16>, vector<16x128xf32> -> vector<16x128xf32>
    %c14_i32 = arith.constant 14 : i32
    %15 = tpu.dynamic_rotate %14 by %c14_i32 dim 0 : vector<16x128xf32>, i32 -> vector<16x128xf32>
    %16 = arith.addf %12, %15 : vector<16x128xf32>
    %c0_9 = arith.constant 0 : index
    %c0_10 = arith.constant 0 : index
    %17 = vector.load %arg5[%c0_9, %c0_10] : memref<1x128xf32, #tpu.memory_space<vmem>>, vector<1x128xf32>
    %18 = vector.broadcast %17 : vector<1x128xf32> to vector<16x128xf32>
    %19 = arith.addf %16, %18 : vector<16x128xf32>
    %cst_11 = arith.constant 0.000000e+00 : f32
    %20 = vector.broadcast %cst_11 : f32 to vector<16x128xf32>
    %21 = arith.maximumf %19, %20 : vector<16x128xf32>
    %22 = vector.shape_cast %21 : vector<16x128xf32> to vector<2x8x128xf32>
    %23 = tpu.iota {dimensions = array<i32: 1>} : vector<2x8x128xi32>
    %c0_12 = arith.constant 0 : index
    %c0_13 = arith.constant 0 : index
    %24 = vector.load %arg6[%c0_12, %c0_13] : memref<1x128xi32, #tpu.memory_space<vmem>>, vector<1x128xi32>
    %25 = vector.shape_cast %24 : vector<1x128xi32> to vector<1x1x128xi32>
    %26 = vector.broadcast %25 : vector<1x1x128xi32> to vector<2x8x128xi32>
    %27 = arith.cmpi slt, %23, %26 : vector<2x8x128xi32>
    %cst_14 = arith.constant 0.000000e+00 : f32
    %28 = vector.broadcast %cst_14 : f32 to vector<2x8x128xf32>
    %29 = arith.select %27, %22, %28 : vector<2x8x128xi1>, vector<2x8x128xf32>
    %cst_15 = arith.constant dense<0xFF800000> : vector<2x128xf32>
    %30 = vector.multi_reduction <maximumf>, %29, %cst_15 [1] : vector<2x8x128xf32> to vector<2x128xf32>
    %c0_16 = arith.constant 0 : index
    %c0_17 = arith.constant 0 : index
    %31 = vector.load %arg7[%c0_16, %c0_17] : memref<128x128xf32, #tpu.memory_space<vmem>>, vector<128x128xf32>
    %cst_18 = arith.constant dense<0.000000e+00> : vector<2x128xf32>
    %32 = tpu.matmul %30, %31, %cst_18 {dimension_numbers = #tpu.dot_dimension_numbers<[1], [0], [0], [1], [0, 0, 1, 1], [], []>} : vector<2x128xf32>, vector<128x128xf32>, vector<2x128xf32> -> vector<2x128xf32>
    %c0_19 = arith.constant 0 : index
    %c0_20 = arith.constant 0 : index
    %33 = vector.load %arg8[%c0_19, %c0_20] : memref<1x128xf32, #tpu.memory_space<vmem>>, vector<1x128xf32>
    %34 = vector.broadcast %33 : vector<1x128xf32> to vector<2x128xf32>
    %35 = arith.addf %32, %34 : vector<2x128xf32>
    %cst_21 = arith.constant 0.000000e+00 : f32
    %36 = vector.broadcast %cst_21 : f32 to vector<2x128xf32>
    %37 = arith.subf %36, %35 : vector<2x128xf32>
    %38 = math.exp %37 : vector<2x128xf32>
    %cst_22 = arith.constant 1.000000e+00 : f32
    %39 = vector.broadcast %cst_22 : f32 to vector<2x128xf32>
    %40 = arith.addf %39, %38 : vector<2x128xf32>
    %41 = tpu.reciprocal %40 {approx = true} : vector<2x128xf32> -> vector<2x128xf32>
    %cst_23 = arith.constant 0.000000e+00 : f32
    %42 = vector.broadcast %cst_23 : f32 to vector<2x128xf32>
    %43 = arith.maximumf %35, %42 : vector<2x128xf32>
    %44 = arith.mulf %41, %43 : vector<2x128xf32>
    %cst_24 = arith.constant 1.000000e+00 : f32
    %45 = vector.broadcast %cst_24 : f32 to vector<2x128xf32>
    %46 = arith.subf %45, %41 : vector<2x128xf32>
    %47 = arith.mulf %46, %30 : vector<2x128xf32>
    %48 = arith.addf %44, %47 : vector<2x128xf32>
    %c0_25 = arith.constant 0 : index
    %c0_26 = arith.constant 0 : index
    %49 = vector.load %arg9[%c0_25, %c0_26] : memref<128x128xf32, #tpu.memory_space<vmem>>, vector<128x128xf32>
    %cst_27 = arith.constant dense<0.000000e+00> : vector<2x128xf32>
    %50 = tpu.matmul %48, %49, %cst_27 {dimension_numbers = #tpu.dot_dimension_numbers<[1], [0], [0], [1], [0, 0, 1, 1], [], []>} : vector<2x128xf32>, vector<128x128xf32>, vector<2x128xf32> -> vector<2x128xf32>
    %c0_28 = arith.constant 0 : index
    %c0_29 = arith.constant 0 : index
    %51 = vector.load %arg10[%c0_28, %c0_29] : memref<1x128xf32, #tpu.memory_space<vmem>>, vector<1x128xf32>
    %52 = vector.broadcast %51 : vector<1x128xf32> to vector<2x128xf32>
    %53 = arith.addf %50, %52 : vector<2x128xf32>
    %cst_30 = arith.constant dense<0xFF800000> : vector<2xf32>
    %54 = vector.multi_reduction <maximumf>, %53, %cst_30 [1] : vector<2x128xf32> to vector<2xf32>
    %55 = vector.shape_cast %54 : vector<2xf32> to vector<2x1xf32>
    %56 = vector.broadcast %55 : vector<2x1xf32> to vector<2x128xf32>
    %57 = arith.subf %53, %56 : vector<2x128xf32>
    %58 = math.exp %57 : vector<2x128xf32>
    %cst_31 = arith.constant dense<0.000000e+00> : vector<2xf32>
    %59 = vector.multi_reduction <add>, %58, %cst_31 [1] : vector<2x128xf32> to vector<2xf32>
    %60 = vector.shape_cast %59 : vector<2xf32> to vector<2x1xf32>
    %61 = math.log %60 : vector<2x1xf32>
    %62 = vector.broadcast %61 : vector<2x1xf32> to vector<2x128xf32>
    %63 = arith.subf %57, %62 : vector<2x128xf32>
    %c0_32 = arith.constant 0 : index
    %c0_33 = arith.constant 0 : index
    %64 = vector.load %arg11[%c0_32, %c0_33] : memref<2x128xf32, #tpu.memory_space<vmem>>, vector<2x128xf32>
    tpu.vector_store %arg11[%c0_32, %c0_33], %63 {strides = array<i32>} : memref<2x128xf32, #tpu.memory_space<vmem>>, vector<2x128xf32>,
    return
  }
  func.func @transform_0(%arg0: i32) -> (i32, i32) {
    %c0_i32 = arith.constant 0 : i32
    %c0_i32_0 = arith.constant 0 : i32
    return %arg0, %c0_i32 : i32, i32
  }
  func.func @transform_1(%arg0: i32) -> (i32, i32) {
    %c0_i32 = arith.constant 0 : i32
    %c0_i32_0 = arith.constant 0 : i32
    %c0_i32_1 = arith.constant 0 : i32
    return %c0_i32, %c0_i32_0 : i32, i32
  }
  func.func @transform_2(%arg0: i32) -> (i32, i32) {
    %c0_i32 = arith.constant 0 : i32
    %c0_i32_0 = arith.constant 0 : i32
    %c0_i32_1 = arith.constant 0 : i32
    return %c0_i32, %c0_i32_0 : i32, i32
  }
  func.func @transform_3(%arg0: i32) -> (i32, i32) {
    %c0_i32 = arith.constant 0 : i32
    %c0_i32_0 = arith.constant 0 : i32
    %c0_i32_1 = arith.constant 0 : i32
    return %c0_i32, %c0_i32_0 : i32, i32
  }
  func.func @transform_4(%arg0: i32) -> (i32, i32) {
    %c0_i32 = arith.constant 0 : i32
    %c0_i32_0 = arith.constant 0 : i32
    %c0_i32_1 = arith.constant 0 : i32
    return %c0_i32, %c0_i32_0 : i32, i32
  }
  func.func @transform_5(%arg0: i32) -> (i32, i32) {
    %c0_i32 = arith.constant 0 : i32
    %c0_i32_0 = arith.constant 0 : i32
    %c0_i32_1 = arith.constant 0 : i32
    return %c0_i32, %c0_i32_0 : i32, i32
  }
  func.func @transform_6(%arg0: i32) -> (i32, i32) {
    %c0_i32 = arith.constant 0 : i32
    %c0_i32_0 = arith.constant 0 : i32
    %c0_i32_1 = arith.constant 0 : i32
    return %c0_i32, %c0_i32_0 : i32, i32
  }
  func.func @transform_7(%arg0: i32) -> (i32, i32) {
    %c0_i32 = arith.constant 0 : i32
    %c0_i32_0 = arith.constant 0 : i32
    %c0_i32_1 = arith.constant 0 : i32
    return %c0_i32, %c0_i32_0 : i32, i32
  }
  func.func @transform_8(%arg0: i32) -> (i32, i32) {
    %c0_i32 = arith.constant 0 : i32
    %c0_i32_0 = arith.constant 0 : i32
    %c0_i32_1 = arith.constant 0 : i32
    return %c0_i32, %c0_i32_0 : i32, i32
  }
  func.func @transform_9(%arg0: i32) -> (i32, i32) {
    %c0_i32 = arith.constant 0 : i32
    %c0_i32_0 = arith.constant 0 : i32
    %c0_i32_1 = arith.constant 0 : i32
    return %c0_i32, %c0_i32_0 : i32, i32
  }
  func.func @transform_10(%arg0: i32) -> (i32, i32) {
    %c0_i32 = arith.constant 0 : i32
    %c0_i32_0 = arith.constant 0 : i32
    return %arg0, %c0_i32 : i32, i32
  }
}

</mosaic_0001>

<llo_original>
// kernel: annex_forward.1
$region0: #{annex_forward.1}
  #allocation0 [shape = 'u32[]', space=smem, size = 0x4, offset = 0x4, fixed_abs, tag = 'smem constant byte address 0x4 - core index']
  #allocation1 [shape = 'u32[144,128]{1,0:T(1,128)}', space=vmem, size = 0x12000, scoped, tag = 'internal scratch']
  %s0 = inlined_call_operand.vmem [shape: s32[16,1], index: 0, kind: input, shape index: {}]
  %s1 = inlined_call_operand.hbm [shape: bf16[128,128], index: 1, kind: input, shape index: {}]
  %s2 = inlined_call_operand.hbm [shape: bf16[128,128], index: 2, kind: input, shape index: {}]
  %s3 = inlined_call_operand.hbm [shape: bf16[128,128], index: 3, kind: input, shape index: {}]
  %s4 = inlined_call_operand.vmem [shape: f32[1,128], index: 4, kind: input, shape index: {}]
  %s5 = inlined_call_operand.vmem [shape: s32[1,128], index: 5, kind: input, shape index: {}]
  %s6 = inlined_call_operand.hbm [shape: f32[128,128], index: 6, kind: input, shape index: {}]
  %s7 = inlined_call_operand.vmem [shape: f32[1,128], index: 7, kind: input, shape index: {}]
  %s8 = inlined_call_operand.hbm [shape: f32[128,128], index: 8, kind: input, shape index: {}]
  %s9 = inlined_call_operand.vmem [shape: f32[1,128], index: 9, kind: input, shape index: {}]
  %s10 = inlined_call_operand.hbm [shape: f32[2,128], index: 10, kind: output, shape index: {}]
  %s11 = sld [smem:[#allocation0]]
  $region70: #{annex_forward.1} parent=0
    _
  %s13 = ssub.s32 1, %s11
  %s14 = scalar_select 0, %s13, %s11
  $region1: #{annex_forward.1} parent=0
    #allocation2 [shape = 'u8[32768]{0}', space=vmem, size = 0x8000, scoped, tag = 'input window, operand 1, single buffered']
    #allocation3 [shape = 's32[1]{0}', space=sflag, size = 0x4, scoped, tag = 'scoped memory for annex_forward.1']
    #allocation4 [shape = 's32[1]{0}', space=sflag, size = 0x4, scoped, tag = 'scoped memory for annex_forward.1']
    #allocation5 [shape = 'u8[32768]{0}', space=vmem, size = 0x8000, scoped, tag = 'input window, operand 2, single buffered']
    #allocation6 [shape = 's32[1]{0}', space=sflag, size = 0x4, scoped, tag = 'scoped memory for annex_forward.1']
    #allocation7 [shape = 'u8[32768]{0}', space=vmem, size = 0x8000, scoped, tag = 'input window, operand 3, single buffered']
    #allocation8 [shape = 'u8[65536]{0}', space=vmem, size = 0x10000, scoped, tag = 'input window, operand 6, single buffered']
    #allocation9 [shape = 's32[1]{0}', space=sflag, size = 0x4, scoped, tag = 'scoped memory for annex_forward.1']
    #allocation10 [shape = 'u8[65536]{0}', space=vmem, size = 0x10000, scoped, tag = 'input window, operand 8, single buffered']
    #allocation11 [shape = 'u8[1024]{0}', space=vmem, size = 0x400, scoped, tag = 'output window, operand 0, single buffered']
    %15 = vsyncpa [#allocation3], 0
    %16 = vsyncpa [#allocation6], 0
    %17 = vsyncpa [#allocation9], 0
    %18 = vsyncpa [#allocation4], 0
    // Predicated region
    $region2: #{annex_forward.1} parent=1 // pred_check
      _
    $region3: #{annex_forward.1} parent=1 // pred_check_branch
      %20 = sbr.rel (0) target = $region5
    $region4: #{annex_forward.1} parent=1 // pred_region
      _
    $region5: #{annex_forward.1} parent=1 // pred_fallthru
      _
    // Predicated region
    $region6: #{annex_forward.1} parent=1 // pred_check
      _
    $region7: #{annex_forward.1} parent=1 // pred_check_branch
      %22 = sbr.rel (0) target = $region9
    $region8: #{annex_forward.1} parent=1 // pred_region
      %s24 = ssub.s32 1024, 1024
      %25 = vsyncadd [#allocation3], %s24
      %s26 = sshll.u32 [#allocation2], 4
      %s27 = int_to_ptr.vmem [resolvable:$true] %s26
      %32 = dma.hbm_to_vmem [thread:$0]  %s1, 1024, %s27, [#allocation3], 64, 64, 4
    $region9: #{annex_forward.1} parent=1 // pred_fallthru
      _
    // Predicated region
    $region10: #{annex_forward.1} parent=1 // pred_check
      _
    $region11: #{annex_forward.1} parent=1 // pred_check_branch
      %34 = sbr.rel (0) target = $region13
    $region12: #{annex_forward.1} parent=1 // pred_region
      %s36 = ssub.s32 1024, 1024
      %37 = vsyncadd [#allocation6], %s36
      %s38 = sshll.u32 [#allocation5], 4
      %s39 = int_to_ptr.vmem [resolvable:$true] %s38
      %44 = dma.hbm_to_vmem [thread:$0]  %s2, 1024, %s39, [#allocation6], 64, 64, 4
    $region13: #{annex_forward.1} parent=1 // pred_fallthru
      _
    // Predicated region
    $region14: #{annex_forward.1} parent=1 // pred_check
      _
    $region15: #{annex_forward.1} parent=1 // pred_check_branch
      %46 = sbr.rel (0) target = $region17
    $region16: #{annex_forward.1} parent=1 // pred_region
      %s48 = ssub.s32 1024, 1024
      %49 = vsyncadd [#allocation6], %s48
      %s50 = sshll.u32 [#allocation7], 4
      %s51 = int_to_ptr.vmem [resolvable:$true] %s50
      %56 = dma.hbm_to_vmem [thread:$0]  %s3, 1024, %s51, [#allocation6], 64, 64, 4
    $region17: #{annex_forward.1} parent=1 // pred_fallthru
      _
    // Predicated region
    $region18: #{annex_forward.1} parent=1 // pred_check
      _
    $region19: #{annex_forward.1} parent=1 // pred_check_branch
      %58 = sbr.rel (0) target = $region21
    $region20: #{annex_forward.1} parent=1 // pred_region
      _
    $region21: #{annex_forward.1} parent=1 // pred_fallthru
      _
    // Predicated region
    $region22: #{annex_forward.1} parent=1 // pred_check
      _
    $region23: #{annex_forward.1} parent=1 // pred_check_branch
      %60 = sbr.rel (0) target = $region25
    $region24: #{annex_forward.1} parent=1 // pred_region
      _
    $region25: #{annex_forward.1} parent=1 // pred_fallthru
      _
    // Predicated region
    $region26: #{annex_forward.1} parent=1 // pred_check
      _
    $region27: #{annex_forward.1} parent=1 // pred_check_branch
      %62 = sbr.rel (0) target = $region29
    $region28: #{annex_forward.1} parent=1 // pred_region
      %s64 = ssub.s32 2048, 2048
      %65 = vsyncadd [#allocation9], %s64
      %s66 = sshll.u32 [#allocation8], 4
      %s67 = int_to_ptr.vmem [resolvable:$true] %s66
      %72 = dma.hbm_to_vmem [thread:$0]  %s6, 2048, %s67, [#allocation9], 128, 128, 8
    $region29: #{annex_forward.1} parent=1 // pred_fallthru
      _
    // Predicated region
    $region30: #{annex_forward.1} parent=1 // pred_check
      _
    $region31: #{annex_forward.1} parent=1 // pred_check_branch
      %74 = sbr.rel (0) target = $region33
    $region32: #{annex_forward.1} parent=1 // pred_region
      _
    $region33: #{annex_forward.1} parent=1 // pred_fallthru
      _
    // Predicated region
    $region34: #{annex_forward.1} parent=1 // pred_check
      _
    $region35: #{annex_forward.1} parent=1 // pred_check_branch
      %76 = sbr.rel (0) target = $region37
    $region36: #{annex_forward.1} parent=1 // pred_region
      %s78 = ssub.s32 2048, 2048
      %79 = vsyncadd [#allocation9], %s78
      %s80 = sshll.u32 [#allocation10], 4
      %s81 = int_to_ptr.vmem [resolvable:$true] %s80
      %86 = dma.hbm_to_vmem [thread:$0]  %s8, 2048, %s81, [#allocation9], 128, 128, 8
    $region37: #{annex_forward.1} parent=1 // pred_fallthru
      _
    // Predicated region
    $region38: #{annex_forward.1} parent=1 // pred_check
      _
    $region39: #{annex_forward.1} parent=1 // pred_check_branch
      %88 = sbr.rel (0) target = $region41
    $region40: #{annex_forward.1} parent=1 // pred_region
      _
    $region41: #{annex_forward.1} parent=1 // pred_fallthru
      _
    // Predicated region
    $region42: #{annex_forward.1} parent=1 // pred_check
      _
    $region43: #{annex_forward.1} parent=1 // pred_check_branch
      %90 = sbr.rel (0) target = $region45
    $region44: #{annex_forward.1} parent=1 // pred_region
      %91 = dma.done [#allocation3], 1024
    $region45: #{annex_forward.1} parent=1 // pred_fallthru
      _
    // Predicated region
    $region46: #{annex_forward.1} parent=1 // pred_check
      _
    $region47: #{annex_forward.1} parent=1 // pred_check_branch
      %93 = sbr.rel (0) target = $region49
    $region48: #{annex_forward.1} parent=1 // pred_region
      %94 = dma.done [#allocation6], 1024
    $region49: #{annex_forward.1} parent=1 // pred_fallthru
      _
    // Predicated region
    $region50: #{annex_forward.1} parent=1 // pred_check
      _
    $region51: #{annex_forward.1} parent=1 // pred_check_branch
      %96 = sbr.rel (0) target = $region53
    $region52: #{annex_forward.1} parent=1 // pred_region
      %97 = dma.done [#allocation6], 1024
    $region53: #{annex_forward.1} parent=1 // pred_fallthru
      _
    // Predicated region
    $region54: #{annex_forward.1} parent=1 // pred_check
      _
    $region55: #{annex_forward.1} parent=1 // pred_check_branch
      %99 = sbr.rel (0) target = $region57
    $region56: #{annex_forward.1} parent=1 // pred_region
      %100 = dma.done [#allocation9], 2048
    $region57: #{annex_forward.1} parent=1 // pred_fallthru
      _
    // Predicated region
    $region58: #{annex_forward.1} parent=1 // pred_check
      _
    $region59: #{annex_forward.1} parent=1 // pred_check_branch
      %102 = sbr.rel (0) target = $region61
    $region60: #{annex_forward.1} parent=1 // pred_region
      %103 = dma.done [#allocation9], 2048
    $region61: #{annex_forward.1} parent=1 // pred_fallthru
      _
    %v105 = vld [vmem:[%s0] sm:$0xff]
    %v106 = vld [vmem:[%s0 + $0x8] sm:$0xff]
    %v107 = vlaneseq
    %v108 = vand.u32 %v107, 127
    %109 = vset.pattern.permute.xlu0 0
    %110 = vperm.xlu0 %109, %v105
    %v111 = vpop.permute.xlu0 %110
    %112 = vset.pattern.permute.xlu0 0
    %113 = vperm.xlu0 %112, %v106
    %v114 = vpop.permute.xlu0 %113
    %vm115 = vcmp.eq.s32.totalorder %v108, %v111
    %vm116 = vcmp.eq.s32.totalorder %v108, %v114
    %v117 = vsel %vm115, 1, 0
    %v118 = vsel %vm116, 1, 0
    %v119 = vcvt.s32.f32 %v117
    %v120 = vcvt.s32.f32 %v118
    %v121 = vpack.c.bf16 %v120, %v119
    %v122 = vld [vmem:[#allocation2] sm:$0xf]
    %v123 = vld [vmem:[#allocation2 + $0x4] sm:$0xf]
    %v124 = vld [vmem:[#allocation2 + $0x8] sm:$0xf]
    %v125 = vld [vmem:[#allocation2 + $0xc] sm:$0xf]
    %v126 = vld [vmem:[#allocation2 + $0x10] sm:$0xf]
    %v127 = vld [vmem:[#allocation2 + $0x14] sm:$0xf]
    %v128 = vld [vmem:[#allocation2 + $0x18] sm:$0xf]
    %v129 = vld [vmem:[#allocation2 + $0x1c] sm:$0xf]
    %v130 = vld [vmem:[#allocation2 + $0x20] sm:$0xf]
    %v131 = vld [vmem:[#allocation2 + $0x24] sm:$0xf]
    %v132 = vld [vmem:[#allocation2 + $0x28] sm:$0xf]
    %v133 = vld [vmem:[#allocation2 + $0x2c] sm:$0xf]
    %v134 = vld [vmem:[#allocation2 + $0x30] sm:$0xf]
    %v135 = vld [vmem:[#allocation2 + $0x34] sm:$0xf]
    %v136 = vld [vmem:[#allocation2 + $0x38] sm:$0xf]
    %v137 = vld [vmem:[#allocation2 + $0x3c] sm:$0xf]
    %v138 = vld [vmem:[#allocation5] sm:$0xf]
    %v139 = vld [vmem:[#allocation5 + $0x4] sm:$0xf]
    %v140 = vld [vmem:[#allocation5 + $0x8] sm:$0xf]
    %v141 = vld [vmem:[#allocation5 + $0xc] sm:$0xf]
    %v142 = vld [vmem:[#allocation5 + $0x10] sm:$0xf]
    %v143 = vld [vmem:[#allocation5 + $0x14] sm:$0xf]
    %v144 = vld [vmem:[#allocation5 + $0x18] sm:$0xf]
    %v145 = vld [vmem:[#allocation5 + $0x1c] sm:$0xf]
    %v146 = vld [vmem:[#allocation5 + $0x20] sm:$0xf]
    %v147 = vld [vmem:[#allocation5 + $0x24] sm:$0xf]
    %v148 = vld [vmem:[#allocation5 + $0x28] sm:$0xf]
    %v149 = vld [vmem:[#allocation5 + $0x2c] sm:$0xf]
    %v150 = vld [vmem:[#allocation5 + $0x30] sm:$0xf]
    %v151 = vld [vmem:[#allocation5 + $0x34] sm:$0xf]
    %v152 = vld [vmem:[#allocation5 + $0x38] sm:$0xf]
    %v153 = vld [vmem:[#allocation5 + $0x3c] sm:$0xf]
    %v170 = vunpack.c.l.b16 %v138
    %v171 = vunpack.c.l.b16 %v139
    %v172 = vunpack.c.l.b16 %v140
    %v173 = vunpack.c.l.b16 %v141
    %v174 = vunpack.c.l.b16 %v142
    %v175 = vunpack.c.l.b16 %v143
    %v176 = vunpack.c.l.b16 %v144
    %v177 = vunpack.c.l.b16 %v145
    %v178 = vunpack.c.l.b16 %v146
    %v179 = vunpack.c.l.b16 %v147
    %v180 = vunpack.c.l.b16 %v148
    %v181 = vunpack.c.l.b16 %v149
    %v182 = vunpack.c.l.b16 %v150
    %v183 = vunpack.c.l.b16 %v151
    %v184 = vunpack.c.l.b16 %v152
    %v185 = vunpack.c.l.b16 %v153
    %v186 = vpack.c.b16 %v171, %v170
    %v187 = vpack.c.b16 %v173, %v172
    %v188 = vpack.c.b16 %v175, %v174
    %v189 = vpack.c.b16 %v177, %v176
    %v190 = vpack.c.b16 %v179, %v178
    %v191 = vpack.c.b16 %v181, %v180
    %v192 = vpack.c.b16 %v183, %v182
    %v193 = vpack.c.b16 %v185, %v184
    %202 = vmatprep.subr.bf16.mxu0 0
    %203 = vmatpush1.bf16.msra.mxu0 %v193
    %204 = vmatprep.subr.bf16.mxu0 0
    %205 = vmatpush1.bf16.msra.mxu0 %v192
    %206 = vmatprep.subr.bf16.mxu0 0
    %207 = vmatpush1.bf16.msra.mxu0 %v191
    %208 = vmatprep.subr.bf16.mxu0 0
    %209 = vmatpush1.bf16.msra.mxu0 %v190
    %210 = vmatprep.subr.bf16.mxu0 0
    %211 = vmatpush1.bf16.msra.mxu0 %v189
    %212 = vmatprep.subr.bf16.mxu0 0
    %213 = vmatpush1.bf16.msra.mxu0 %v188
    %214 = vmatprep.subr.bf16.mxu0 0
    %215 = vmatpush1.bf16.msra.mxu0 %v187
    %216 = vmatprep.subr.bf16.mxu0 0
    %217 = vmatpush1.bf16.msra.mxu0 %v186
    %218 = vmatprep.subr.bf16.mxu0 0
    %219 = vmatpush2.bf16.msra.mxu0 0
    %220 = vmatprep.subr.bf16.mxu0 0
    %221 = vmatpush2.bf16.msra.mxu0 0
    %222 = vmatprep.subr.bf16.mxu0 0
    %223 = vmatpush2.bf16.msra.mxu0 0
    %224 = vmatprep.subr.bf16.mxu0 0
    %225 = vmatpush2.bf16.msra.mxu0 0
    %226 = vmatprep.subr.bf16.mxu0 0
    %227 = vmatpush2.bf16.msra.mxu0 0
    %228 = vmatprep.subr.bf16.mxu0 0
    %229 = vmatpush2.bf16.msra.mxu0 0
    %230 = vmatprep.subr.bf16.mxu0 0
    %231 = vmatpush2.bf16.msra.mxu0 0
    %232 = vmatprep.subr.bf16.mxu0 0
    %233 = vmatpush2.bf16.msra.mxu0 0
    %234 = vmatprep.mubr.bf16.mxu0 0
    %235 = vmatmul.mubr.bf16.gmra.mxu0 %v121
    %v236 = vpop.f32.mrf.mxu0
    %v237 = vadd.f32 0.0, %v236
    %v238 = vpop.f32.mrf.mxu0
    %v239 = vpop.f32.mrf.mxu0
    %v240 = vadd.f32 0.0, %v239
    %v241 = vpop.f32.mrf.mxu0
    %242 = vdwg.mxu0
    %v243 = vrot.slane %v237, 1
    %v244 = vrot.slane %v240, 1
    %v245 = vlaneseq
    %v246 = vshrl.u32 %v245, 7
    %vm247 = vcmp.lt.s32.totalorder %v246, 7
    %v248 = vsel %vm247, %v243, %v244
    %v249 = vsel %vm247, %v244, %v243
    %v266 = vunpack.c.l.b16 %v122
    %v267 = vunpack.c.l.b16 %v123
    %v268 = vunpack.c.l.b16 %v124
    %v269 = vunpack.c.l.b16 %v125
    %v270 = vunpack.c.l.b16 %v126
    %v271 = vunpack.c.l.b16 %v127
    %v272 = vunpack.c.l.b16 %v128
    %v273 = vunpack.c.l.b16 %v129
    %v274 = vunpack.c.l.b16 %v130
    %v275 = vunpack.c.l.b16 %v131
    %v276 = vunpack.c.l.b16 %v132
    %v277 = vunpack.c.l.b16 %v133
    %v278 = vunpack.c.l.b16 %v134
    %v279 = vunpack.c.l.b16 %v135
    %v280 = vunpack.c.l.b16 %v136
    %v281 = vunpack.c.l.b16 %v137
    %v282 = vpack.c.b16 %v267, %v266
    %v283 = vpack.c.b16 %v269, %v268
    %v284 = vpack.c.b16 %v271, %v270
    %v285 = vpack.c.b16 %v273, %v272
    %v286 = vpack.c.b16 %v275, %v274
    %v287 = vpack.c.b16 %v277, %v276
    %v288 = vpack.c.b16 %v279, %v278
    %v289 = vpack.c.b16 %v281, %v280
    %298 = vmatprep.subr.bf16.mxu0 0
    %299 = vmatpush1.bf16.msra.mxu0 %v289
    %300 = vmatprep.subr.bf16.mxu0 0
    %301 = vmatpush1.bf16.msra.mxu0 %v288
    %302 = vmatprep.subr.bf16.mxu0 0
    %303 = vmatpush1.bf16.msra.mxu0 %v287
    %304 = vmatprep.subr.bf16.mxu0 0
    %305 = vmatpush1.bf16.msra.mxu0 %v286
    %306 = vmatprep.subr.bf16.mxu0 0
    %307 = vmatpush1.bf16.msra.mxu0 %v285
    %308 = vmatprep.subr.bf16.mxu0 0
    %309 = vmatpush1.bf16.msra.mxu0 %v284
    %310 = vmatprep.subr.bf16.mxu0 0
    %311 = vmatpush1.bf16.msra.mxu0 %v283
    %312 = vmatprep.subr.bf16.mxu0 0
    %313 = vmatpush1.bf16.msra.mxu0 %v282
    %314 = vmatprep.subr.bf16.mxu0 0
    %315 = vmatpush2.bf16.msra.mxu0 0
    %316 = vmatprep.subr.bf16.mxu0 0
    %317 = vmatpush2.bf16.msra.mxu0 0
    %318 = vmatprep.subr.bf16.mxu0 0
    %319 = vmatpush2.bf16.msra.mxu0 0
    %320 = vmatprep.subr.bf16.mxu0 0
    %321 = vmatpush2.bf16.msra.mxu0 0
    %322 = vmatprep.subr.bf16.mxu0 0
    %323 = vmatpush2.bf16.msra.mxu0 0
    %324 = vmatprep.subr.bf16.mxu0 0
    %325 = vmatpush2.bf16.msra.mxu0 0
    %326 = vmatprep.subr.bf16.mxu0 0
    %327 = vmatpush2.bf16.msra.mxu0 0
    %328 = vmatprep.subr.bf16.mxu0 0
    %329 = vmatpush2.bf16.msra.mxu0 0
    %330 = vmatprep.mubr.bf16.mxu0 0
    %331 = vmatmul.mubr.bf16.gmra.mxu0 %v121
    %v332 = vpop.f32.mrf.mxu0
    %v333 = vadd.f32 %v248, %v332
    %v334 = vpop.f32.mrf.mxu0
    %v335 = vpop.f32.mrf.mxu0
    %v336 = vadd.f32 %v249, %v335
    %v337 = vpop.f32.mrf.mxu0
    %338 = vdwg.mxu0
    %v339 = vld [vmem:[#allocation7] sm:$0xf]
    %v340 = vld [vmem:[#allocation7 + $0x4] sm:$0xf]
    %v341 = vld [vmem:[#allocation7 + $0x8] sm:$0xf]
    %v342 = vld [vmem:[#allocation7 + $0xc] sm:$0xf]
    %v343 = vld [vmem:[#allocation7 + $0x10] sm:$0xf]
    %v344 = vld [vmem:[#allocation7 + $0x14] sm:$0xf]
    %v345 = vld [vmem:[#allocation7 + $0x18] sm:$0xf]
    %v346 = vld [vmem:[#allocation7 + $0x1c] sm:$0xf]
    %v347 = vld [vmem:[#allocation7 + $0x20] sm:$0xf]
    %v348 = vld [vmem:[#allocation7 + $0x24] sm:$0xf]
    %v349 = vld [vmem:[#allocation7 + $0x28] sm:$0xf]
    %v350 = vld [vmem:[#allocation7 + $0x2c] sm:$0xf]
    %v351 = vld [vmem:[#allocation7 + $0x30] sm:$0xf]
    %v352 = vld [vmem:[#allocation7 + $0x34] sm:$0xf]
    %v353 = vld [vmem:[#allocation7 + $0x38] sm:$0xf]
    %v354 = vld [vmem:[#allocation7 + $0x3c] sm:$0xf]
    %v371 = vunpack.c.l.b16 %v339
    %v372 = vunpack.c.l.b16 %v340
    %v373 = vunpack.c.l.b16 %v341
    %v374 = vunpack.c.l.b16 %v342
    %v375 = vunpack.c.l.b16 %v343
    %v376 = vunpack.c.l.b16 %v344
    %v377 = vunpack.c.l.b16 %v345
    %v378 = vunpack.c.l.b16 %v346
    %v379 = vunpack.c.l.b16 %v347
    %v380 = vunpack.c.l.b16 %v348
    %v381 = vunpack.c.l.b16 %v349
    %v382 = vunpack.c.l.b16 %v350
    %v383 = vunpack.c.l.b16 %v351
    %v384 = vunpack.c.l.b16 %v352
    %v385 = vunpack.c.l.b16 %v353
    %v386 = vunpack.c.l.b16 %v354
    %v387 = vpack.c.b16 %v372, %v371
    %v388 = vpack.c.b16 %v374, %v373
    %v389 = vpack.c.b16 %v376, %v375
    %v390 = vpack.c.b16 %v378, %v377
    %v391 = vpack.c.b16 %v380, %v379
    %v392 = vpack.c.b16 %v382, %v381
    %v393 = vpack.c.b16 %v384, %v383
    %v394 = vpack.c.b16 %v386, %v385
    %403 = vmatprep.subr.bf16.mxu0 0
    %404 = vmatpush1.bf16.msra.mxu0 %v394
    %405 = vmatprep.subr.bf16.mxu0 0
    %406 = vmatpush1.bf16.msra.mxu0 %v393
    %407 = vmatprep.subr.bf16.mxu0 0
    %408 = vmatpush1.bf16.msra.mxu0 %v392
    %409 = vmatprep.subr.bf16.mxu0 0
    %410 = vmatpush1.bf16.msra.mxu0 %v391
    %411 = vmatprep.subr.bf16.mxu0 0
    %412 = vmatpush1.bf16.msra.mxu0 %v390
    %413 = vmatprep.subr.bf16.mxu0 0
    %414 = vmatpush1.bf16.msra.mxu0 %v389
    %415 = vmatprep.subr.bf16.mxu0 0
    %416 = vmatpush1.bf16.msra.mxu0 %v388
    %417 = vmatprep.subr.bf16.mxu0 0
    %418 = vmatpush1.bf16.msra.mxu0 %v387
    %419 = vmatprep.subr.bf16.mxu0 0
    %420 = vmatpush2.bf16.msra.mxu0 0
    %421 = vmatprep.subr.bf16.mxu0 0
    %422 = vmatpush2.bf16.msra.mxu0 0
    %423 = vmatprep.subr.bf16.mxu0 0
    %424 = vmatpush2.bf16.msra.mxu0 0
    %425 = vmatprep.subr.bf16.mxu0 0
    %426 = vmatpush2.bf16.msra.mxu0 0
    %427 = vmatprep.subr.bf16.mxu0 0
    %428 = vmatpush2.bf16.msra.mxu0 0
    %429 = vmatprep.subr.bf16.mxu0 0
    %430 = vmatpush2.bf16.msra.mxu0 0
    %431 = vmatprep.subr.bf16.mxu0 0
    %432 = vmatpush2.bf16.msra.mxu0 0
    %433 = vmatprep.subr.bf16.mxu0 0
    %434 = vmatpush2.bf16.msra.mxu0 0
    %435 = vmatprep.mubr.bf16.mxu0 0
    %436 = vmatmul.mubr.bf16.gmra.mxu0 %v121
    %v437 = vpop.f32.mrf.mxu0
    %v438 = vadd.f32 0.0, %v437
    %v439 = vpop.f32.mrf.mxu0
    %v440 = vpop.f32.mrf.mxu0
    %v441 = vadd.f32 0.0, %v440
    %v442 = vpop.f32.mrf.mxu0
    %443 = vdwg.mxu0
    %v444 = vrot.slane %v438, 2
    %v445 = vrot.slane %v441, 2
    %vm446 = vcmp.lt.s32.totalorder %v246, 6
    %v447 = vsel %vm446, %v444, %v445
    %v448 = vsel %vm446, %v445, %v444
    %v449 = vadd.f32 %v333, %v447
    %v450 = vadd.f32 %v336, %v448
    %v451 = vld [vmem:[%s4] sm:$0x1]
    %v453 = vlaneseq
    %v454 = vshrl.u32 %v453, 7
    %v455 = vsub.s32 0, %v454
    %v456 = vrot.slane %v451, %v455
    %v458 = vadd.f32 %v449, %v456
    %v459 = vadd.f32 %v450, %v456
    %v460 = vmax.f32 %v458, 0.0
    %v461 = vmax.f32 %v459, 0.0
    %v462 = vld [vmem:[%s5] sm:$0x1]
    %v463 = vlaneseq
    %v464 = vshrl.u32 %v463, 7
    %v465 = vsub.s32 0, %v464
    %v466 = vrot.slane %v462, %v465
    %vm467 = vcmp.lt.s32.totalorder %v246, %v466
    %v468 = vsel %vm467, %v460, 0.0
    %v469 = vsel %vm467, %v461, 0.0
    %v470 = vrot.slane %v468, 4
    %v471 = vmax.f32 %v468, %v470
    %v472 = vrot.slane %v471, 2
    %v473 = vmax.f32 %v471, %v472
    %v474 = vrot.slane %v473, 1
    %v475 = vmax.f32 %v473, %v474
    %v476 = vrot.slane %v469, 4
    %v477 = vmax.f32 %v469, %v476
    %v478 = vrot.slane %v477, 2
    %v479 = vmax.f32 %v477, %v478
    %v480 = vrot.slane %v479, 1
    %v481 = vmax.f32 %v479, %v480
    %v482 = vld [vmem:[#allocation8] sm:$0xff]
    %v483 = vld [vmem:[#allocation8 + $0x8] sm:$0xff]
    %v484 = vld [vmem:[#allocation8 + $0x10] sm:$0xff]
    %v485 = vld [vmem:[#allocation8 + $0x18] sm:$0xff]
    %v486 = vld [vmem:[#allocation8 + $0x20] sm:$0xff]
    %v487 = vld [vmem:[#allocation8 + $0x28] sm:$0xff]
    %v488 = vld [vmem:[#allocation8 + $0x30] sm:$0xff]
    %v489 = vld [vmem:[#allocation8 + $0x38] sm:$0xff]
    %v490 = vld [vmem:[#allocation8 + $0x40] sm:$0xff]
    %v491 = vld [vmem:[#allocation8 + $0x48] sm:$0xff]
    %v492 = vld [vmem:[#allocation8 + $0x50] sm:$0xff]
    %v493 = vld [vmem:[#allocation8 + $0x58] sm:$0xff]
    %v494 = vld [vmem:[#allocation8 + $0x60] sm:$0xff]
    %v495 = vld [vmem:[#allocation8 + $0x68] sm:$0xff]
    %v496 = vld [vmem:[#allocation8 + $0x70] sm:$0xff]
    %v497 = vld [vmem:[#allocation8 + $0x78] sm:$0xff]
    %v498 = vld [vmem:[%s7] sm:$0x1]
    %v500 = vlaneseq
    %v501 = vshrl.u32 %v500, 7
    %v502 = vsub.s32 0, %v501
    %v503 = vrot.slane %v498, %v502
    %vm507 = vcmask 1041409
    %v508 = vsel %vm507, %v481, %v475
    %510 = vmatprep.subr.mxu0 0.0
    %511 = vmatpush1.msra.mxu0 %v497
    %512 = vmatprep.subr.mxu0 0.0
    %513 = vmatpush1.msra.mxu0 %v496
    %514 = vmatprep.subr.mxu0 0.0
    %515 = vmatpush1.msra.mxu0 %v495
    %516 = vmatprep.subr.mxu0 0.0
    %517 = vmatpush1.msra.mxu0 %v494
    %518 = vmatprep.subr.mxu0 0.0
    %519 = vmatpush1.msra.mxu0 %v493
    %520 = vmatprep.subr.mxu0 0.0
    %521 = vmatpush1.msra.mxu0 %v492
    %522 = vmatprep.subr.mxu0 0.0
    %523 = vmatpush1.msra.mxu0 %v491
    %524 = vmatprep.subr.mxu0 0.0
    %525 = vmatpush1.msra.mxu0 %v490
    %526 = vmatprep.subr.mxu0 0.0
    %527 = vmatpush1.msra.mxu0 %v489
    %528 = vmatprep.subr.mxu0 0.0
    %529 = vmatpush1.msra.mxu0 %v488
    %530 = vmatprep.subr.mxu0 0.0
    %531 = vmatpush1.msra.mxu0 %v487
    %532 = vmatprep.subr.mxu0 0.0
    %533 = vmatpush1.msra.mxu0 %v486
    %534 = vmatprep.subr.mxu0 0.0
    %535 = vmatpush1.msra.mxu0 %v485
    %536 = vmatprep.subr.mxu0 0.0
    %537 = vmatpush1.msra.mxu0 %v484
    %538 = vmatprep.subr.mxu0 0.0
    %539 = vmatpush1.msra.mxu0 %v483
    %540 = vmatprep.subr.mxu0 0.0
    %541 = vmatpush1.msra.mxu0 %v482
    %542 = vmatprep.subr.mxu0 0.0
    %543 = vmatpush2.msra.mxu0 0.0
    %544 = vmatprep.subr.mxu0 0.0
    %545 = vmatpush2.msra.mxu0 0.0
    %546 = vmatprep.subr.mxu0 0.0
    %547 = vmatpush2.msra.mxu0 0.0
    %548 = vmatprep.subr.mxu0 0.0
    %549 = vmatpush2.msra.mxu0 0.0
    %550 = vmatprep.subr.mxu0 0.0
    %551 = vmatpush2.msra.mxu0 0.0
    %552 = vmatprep.subr.mxu0 0.0
    %553 = vmatpush2.msra.mxu0 0.0
    %554 = vmatprep.subr.mxu0 0.0
    %555 = vmatpush2.msra.mxu0 0.0
    %556 = vmatprep.subr.mxu0 0.0
    %557 = vmatpush2.msra.mxu0 0.0
    %558 = vmatprep.subr.mxu0 0.0
    %559 = vmatpush2.msra.mxu0 0.0
    %560 = vmatprep.subr.mxu0 0.0
    %561 = vmatpush2.msra.mxu0 0.0
    %562 = vmatprep.subr.mxu0 0.0
    %563 = vmatpush2.msra.mxu0 0.0
    %564 = vmatprep.subr.mxu0 0.0
    %565 = vmatpush2.msra.mxu0 0.0
    %566 = vmatprep.subr.mxu0 0.0
    %567 = vmatpush2.msra.mxu0 0.0
    %568 = vmatprep.subr.mxu0 0.0
    %569 = vmatpush2.msra.mxu0 0.0
    %570 = vmatprep.subr.mxu0 0.0
    %571 = vmatpush2.msra.mxu0 0.0
    %572 = vmatprep.subr.mxu0 0.0
    %573 = vmatpush2.msra.mxu0 0.0
    %574 = vmatprep.mubr.f32.mxu0 0.0
    %575 = vmatmul.mubr.f32.gmra.mxu0 %v508
    %v576 = vpop.f32.mrf.mxu0
    %v577 = vadd.f32 %v503, %v576
    %v578 = vpop.f32.mrf.mxu0
    %579 = vdwg.mxu0
    %v580 = vsub.f32 0.0, %v577
    %v581 = vmul.f32 %v580, 1.442695
    %v582 = vpow.pop %v581
    %v583 = vadd.f32 %v582, 1.0
    %v584 = vrcp.pop %v583
    %v585 = vmax.f32 %v577, 0.0
    %v586 = vmul.f32 %v584, %v585
    %v587 = vsub.f32 1.0, %v584
    %v588 = vmul.f32 %v587, %v508
    %v589 = vadd.f32 %v586, %v588
    %v590 = vld [vmem:[#allocation10] sm:$0xff]
    %v591 = vld [vmem:[#allocation10 + $0x8] sm:$0xff]
    %v592 = vld [vmem:[#allocation10 + $0x10] sm:$0xff]
    %v593 = vld [vmem:[#allocation10 + $0x18] sm:$0xff]
    %v594 = vld [vmem:[#allocation10 + $0x20] sm:$0xff]
    %v595 = vld [vmem:[#allocation10 + $0x28] sm:$0xff]
    %v596 = vld [vmem:[#allocation10 + $0x30] sm:$0xff]
    %v597 = vld [vmem:[#allocation10 + $0x38] sm:$0xff]
    %v598 = vld [vmem:[#allocation10 + $0x40] sm:$0xff]
    %v599 = vld [vmem:[#allocation10 + $0x48] sm:$0xff]
    %v600 = vld [vmem:[#allocation10 + $0x50] sm:$0xff]
    %v601 = vld [vmem:[#allocation10 + $0x58] sm:$0xff]
    %v602 = vld [vmem:[#allocation10 + $0x60] sm:$0xff]
    %v603 = vld [vmem:[#allocation10 + $0x68] sm:$0xff]
    %v604 = vld [vmem:[#allocation10 + $0x70] sm:$0xff]
    %v605 = vld [vmem:[#allocation10 + $0x78] sm:$0xff]
    %v606 = vld [vmem:[%s9] sm:$0x1]
    %v608 = vlaneseq
    %v609 = vshrl.u32 %v608, 7
    %v610 = vsub.s32 0, %v609
    %v611 = vrot.slane %v606, %v610
    %613 = vmatprep.subr.mxu0 0.0
    %614 = vmatpush1.msra.mxu0 %v605
    %615 = vmatprep.subr.mxu0 0.0
    %616 = vmatpush1.msra.mxu0 %v604
    %617 = vmatprep.subr.mxu0 0.0
    %618 = vmatpush1.msra.mxu0 %v603
    %619 = vmatprep.subr.mxu0 0.0
    %620 = vmatpush1.msra.mxu0 %v602
    %621 = vmatprep.subr.mxu0 0.0
    %622 = vmatpush1.msra.mxu0 %v601
    %623 = vmatprep.subr.mxu0 0.0
    %624 = vmatpush1.msra.mxu0 %v600
    %625 = vmatprep.subr.mxu0 0.0
    %626 = vmatpush1.msra.mxu0 %v599
    %627 = vmatprep.subr.mxu0 0.0
    %628 = vmatpush1.msra.mxu0 %v598
    %629 = vmatprep.subr.mxu0 0.0
    %630 = vmatpush1.msra.mxu0 %v597
    %631 = vmatprep.subr.mxu0 0.0
    %632 = vmatpush1.msra.mxu0 %v596
    %633 = vmatprep.subr.mxu0 0.0
    %634 = vmatpush1.msra.mxu0 %v595
    %635 = vmatprep.subr.mxu0 0.0
    %636 = vmatpush1.msra.mxu0 %v594
    %637 = vmatprep.subr.mxu0 0.0
    %638 = vmatpush1.msra.mxu0 %v593
    %639 = vmatprep.subr.mxu0 0.0
    %640 = vmatpush1.msra.mxu0 %v592
    %641 = vmatprep.subr.mxu0 0.0
    %642 = vmatpush1.msra.mxu0 %v591
    %643 = vmatprep.subr.mxu0 0.0
    %644 = vmatpush1.msra.mxu0 %v590
    %645 = vmatprep.subr.mxu0 0.0
    %646 = vmatpush2.msra.mxu0 0.0
    %647 = vmatprep.subr.mxu0 0.0
    %648 = vmatpush2.msra.mxu0 0.0
    %649 = vmatprep.subr.mxu0 0.0
    %650 = vmatpush2.msra.mxu0 0.0
    %651 = vmatprep.subr.mxu0 0.0
    %652 = vmatpush2.msra.mxu0 0.0
    %653 = vmatprep.subr.mxu0 0.0
    %654 = vmatpush2.msra.mxu0 0.0
    %655 = vmatprep.subr.mxu0 0.0
    %656 = vmatpush2.msra.mxu0 0.0
    %657 = vmatprep.subr.mxu0 0.0
    %658 = vmatpush2.msra.mxu0 0.0
    %659 = vmatprep.subr.mxu0 0.0
    %660 = vmatpush2.msra.mxu0 0.0
    %661 = vmatprep.subr.mxu0 0.0
    %662 = vmatpush2.msra.mxu0 0.0
    %663 = vmatprep.subr.mxu0 0.0
    %664 = vmatpush2.msra.mxu0 0.0
    %665 = vmatprep.subr.mxu0 0.0
    %666 = vmatpush2.msra.mxu0 0.0
    %667 = vmatprep.subr.mxu0 0.0
    %668 = vmatpush2.msra.mxu0 0.0
    %669 = vmatprep.subr.mxu0 0.0
    %670 = vmatpush2.msra.mxu0 0.0
    %671 = vmatprep.subr.mxu0 0.0
    %672 = vmatpush2.msra.mxu0 0.0
    %673 = vmatprep.subr.mxu0 0.0
    %674 = vmatpush2.msra.mxu0 0.0
    %675 = vmatprep.subr.mxu0 0.0
    %676 = vmatpush2.msra.mxu0 0.0
    %677 = vmatprep.mubr.f32.mxu0 0.0
    %678 = vmatmul.mubr.f32.gmra.mxu0 %v589
    %v679 = vpop.f32.mrf.mxu0
    %v680 = vadd.f32 %v611, %v679
    %v681 = vpop.f32.mrf.mxu0
    %682 = vdwg.mxu0
    %vm683 = vcmask 1041408
    %v684 = vsel %vm683, %v680, -inf
    %685 = vmax.xlane.f32.xlu0 %v684
    %v686 = vpop.xlane.xlu0 %685
    %v687 = vsub.f32 %v680, %v686
    %v688 = vmul.f32 %v687, 1.442695
    %v689 = vpow.pop %v688
    %v690 = vsel %vm683, %v689, 0.0
    %691 = vadd.xlane.f32.xlu0 %v690
    %v692 = vpop.xlane.xlu0 %691
    %v693 = vlog2.pop %v692
    %v694 = vmul.f32 %v693, 0.6931472
    %v695 = vsub.f32 %v687, %v694
    %696 = vst [vmem:[#allocation11] sm:$0x3] %v695
    // Predicated region
    $region62: #{annex_forward.1} parent=1 // pred_check
      _
    $region63: #{annex_forward.1} parent=1 // pred_check_branch
      %698 = sbr.rel (0) target = $region65
    $region64: #{annex_forward.1} parent=1 // pred_region
      %s700 = ssub.s32 32, 32
      %701 = vsyncadd [#allocation4], %s700
      %s703 = sshll.u32 [#allocation11], 4
      %s704 = int_to_ptr.vmem [resolvable:$true] %s703
      %706 = dma.vmem_to_hbm [thread:$0]  %s704, 32, %s10, [#allocation4]
    $region65: #{annex_forward.1} parent=1 // pred_fallthru
      _
    // Predicated region
    $region66: #{annex_forward.1} parent=1 // pred_check
      _
    $region67: #{annex_forward.1} parent=1 // pred_check_branch
      %708 = sbr.rel (0) target = $region69
    $region68: #{annex_forward.1} parent=1 // pred_region
      %709 = dma.done [#allocation4], 32
    $region69: #{annex_forward.1} parent=1 // pred_fallthru
      _
    %710 = vsyncpa [#allocation3], 1
    %711 = vsyncpa [#allocation6], 1
    %712 = vsyncpa [#allocation9], 1
    %713 = vsyncpa [#allocation4], 1

</llo_original>
